<compile_context>
chip_gen: v5e
topology: v5e:2x2
jax: 0.10.0
libtpu: 0.0.40
codegen_flags: <defaults>
</compile_context>

<pallas_src>
import functools

import jax
import jax.numpy as jnp
from jax.experimental import pallas as pl
from jax.experimental.pallas import tpu as pltpu


def _round_up(x, m):
    return ((x + m - 1) // m) * m


def _gelu(x):
    # tanh-approximate GELU (EUP-friendly).
    # TODO(synk): PyTorch nn.GELU() defaults to the exact erf form (~1e-3 diff).
    return jax.nn.gelu(x, approximate=True)


def _layernorm_padded(v, g, b, lane_mask, n_real, eps=1e-5):
    """LayerNorm over a zero-padded lane axis (two-pass variance).

    `lane_mask` zeroes padded lanes of (v - mu) so the statistics use only the
    `n_real` real channels; gamma/beta are zero-padded so padded outputs stay
    exactly zero.
    """
    mu = jnp.sum(v, axis=-1, keepdims=True) / n_real
    d = (v - mu) * lane_mask
    var = jnp.sum(d * d, axis=-1, keepdims=True) / n_real
    return d * jax.lax.rsqrt(var + eps) * g + b


# ----------------------------- Pallas kernel ---------------------------------

def dwt_mixer_kernel(
    x_ref,                                  # (TB, S, F)    f32 (unpadded F)
    wb_ref, bb_ref,                         # (F, Hp), (1, Hp)
    g1_ref, b1_ref,                         # (1, Hp)       token-mix LN
    wt1t_ref, bt1_ref,                      # (Dtp, S), (Dtp, 1)
    wt2t_ref, bt2_ref,                      # (S, Dtp), (S, 1)
    g2_ref, b2_ref,                         # (1, Hp)       channel-mix LN
    wc1_ref, bc1_ref,                       # (Hp, Dcp), (1, Dcp)
    wc2_ref, bc2_ref,                       # (Dcp, Hp), (1, Hp)
    out_ref,                                # (TB, S, H)    f32 (unpadded H)
    *, hidden_real,
):
    TB, S, F = x_ref.shape
    Hp = wb_ref.shape[1]
    H = out_ref.shape[-1]
    f32 = jnp.float32

    # Lane masks for real hidden channels (padded lanes must stay exactly 0 so
    # LayerNorm statistics are uncontaminated).  Built once per grid step.
    h_mask = (jax.lax.broadcasted_iota(jnp.int32, (1, Hp), 1)
              < hidden_real).astype(f32)                       # (1, Hp)
    h_mask_lane = jnp.tile(h_mask, (1, TB))                    # (1, TB*Hp)

    # ---- bottleneck Linear: one (TB*S, F) x (F, Hp) matmul -------------------
    x = x_ref[...].reshape(TB * S, F)
    h = jnp.dot(x, wb_ref[...], preferred_element_type=f32) + bb_ref[...]

    # ---- token mixing: lane-concatenate the TB batch slabs into a single
    #      (S, TB*Hp) operand -> one matmul pair for the whole block, no
    #      per-batch loop / concatenate ---------------------------------------
    y = _layernorm_padded(h, g1_ref[...], b1_ref[...], h_mask, hidden_real)
    y_lane = y.reshape(TB, S, Hp).transpose(1, 0, 2).reshape(S, TB * Hp)
    u = _gelu(jnp.dot(wt1t_ref[...], y_lane, preferred_element_type=f32)
              + bt1_ref[...])                                  # (Dtp, TB*Hp)
    add = (jnp.dot(wt2t_ref[...], u, preferred_element_type=f32)
           + bt2_ref[...]) * h_mask_lane                       # (S, TB*Hp)
    add = add.reshape(S, TB, Hp).transpose(1, 0, 2).reshape(TB * S, Hp)
    h = h + add

    # ---- channel mixing: single matmul pair over all TB*S rows --------------
    z = _layernorm_padded(h, g2_ref[...], b2_ref[...], h_mask, hidden_real)
    c = _gelu(jnp.dot(z, wc1_ref[...], preferred_element_type=f32)
              + bc1_ref[...])                                  # (TB*S, Dcp)
    c = (jnp.dot(c, wc2_ref[...], preferred_element_type=f32)
         + bc2_ref[...])                                       # (TB*S, Hp)

    # Unpadded store: only the H real channels go back to HBM.
    out_ref[...] = (h + c)[:, :H].reshape(TB, S, H).astype(out_ref.dtype)


# ------------------------- one-time weight preparation -------------------------

def prepare_params(params):
    """One-time layout prep: zero-pad to lane-dense shapes and pre-transpose the
    token-mix weights.  Call once and reuse the result across forward steps so
    no per-call padding/casting runs on device."""
    f32 = jnp.float32
    F, H = params["wb"].shape
    S = params["wt1"].shape[0]
    Dt = params["wt1"].shape[1]
    Dc = params["wc1"].shape[1]
    Hp = _round_up(H, 128)
    Dcp = _round_up(Dc, 128)
    Dtp = _round_up(Dt, 8)

    def pad2(a, r, c):
        return jnp.pad(a, ((0, r - a.shape[0]), (0, c - a.shape[1]))).astype(f32)

    plist = (
        pad2(params["wb"], F, Hp),          # wb    (F, Hp)
        pad2(params["bb"], 1, Hp),          # bb
        pad2(params["ln1g"], 1, Hp),        # g1
        pad2(params["ln1b"], 1, Hp),        # b1
        pad2(params["wt1"].T, Dtp, S),      # wt1t  (Dt, S)
        pad2(params["bt1"].T, Dtp, 1),      # bt1   (Dt, 1)
        pad2(params["wt2"].T, S, Dtp),      # wt2t  (S, Dt)
        pad2(params["bt2"].T, S, 1),        # bt2   (S, 1)
        pad2(params["ln2g"], 1, Hp),        # g2
        pad2(params["ln2b"], 1, Hp),        # b2
        pad2(params["wc1"], Hp, Dcp),       # wc1   (Hp, Dcp)
        pad2(params["bc1"], 1, Dcp),        # bc1
        pad2(params["wc2"], Dcp, Hp),       # wc2   (Dcp, Hp)
        pad2(params["bc2"], 1, Hp),         # bc2
    )
    return plist, H


# ------------------------------- forward wrapper -------------------------------

@functools.partial(jax.jit, static_argnames=("hidden_real",))
def dwt_mixer_forward(x, prepped, *, hidden_real):
    """x: [B, S, F] float32 (unpadded).  Returns [B, S, H] float32."""
    B, S, F = x.shape
    assert S % 8 == 0, "seq_len must be a multiple of 8"
    (wb, bb, g1, b1, wt1t, bt1, wt2t, bt2, g2, b2, wc1, bc1, wc2, bc2) = prepped
    Hp = wb.shape[1]
    Dtp = wt1t.shape[0]
    Dcp = wc1.shape[1]
    H = hidden_real

    # Batch fold: TB batch elements per grid step; keep grid >= 2 whenever
    # B >= 2 so both v7x TensorCores get work (irrelevant on v5e/v6e).
    TB = max(1, min(8, B // 2))
    Bp = _round_up(B, TB)
    x_p = x if Bp == B else jnp.pad(x, ((0, Bp - B), (0, 0), (0, 0)))

    plist = (wb, bb, g1, b1, wt1t, bt1, wt2t, bt2, g2, b2, wc1, bc1, wc2, bc2)

    in_specs = [pl.BlockSpec((TB, S, F), lambda i: (i, 0, 0))]
    # Grid-invariant weights: full-array blocks, constant index_map (fetched once).
    in_specs += [pl.BlockSpec(p.shape, lambda i: (0, 0)) for p in plist]

    # Explicit VMEM budget (weights double-buffered by default + io blocks +
    # rough bound on live f32 intermediates), clamped to v7x's 64 MiB.
    weight_bytes = sum(int(p.size) * p.dtype.itemsize for p in plist)
    io_block_bytes = (TB * S * F + TB * S * H) * 4
    interm_bytes = TB * S * (6 * Hp + Dcp + 2 * Dtp) * 4
    vmem_limit = int(min(64 << 20,
                         max(16 << 20,
                             2 * weight_bytes + 2 * io_block_bytes
                             + interm_bytes + (4 << 20))))

    flops = 2 * Bp * S * (F * Hp + 2 * Dtp * Hp + 2 * Hp * Dcp)
    transcendentals = Bp * (Dtp * Hp + S * Dcp)
    bytes_accessed = Bp * S * (F + H) * 4 + weight_bytes

    out = pl.pallas_call(
        functools.partial(dwt_mixer_kernel, hidden_real=H),
        out_shape=jax.ShapeDtypeStruct((Bp, S, H), jnp.float32),
        grid=(Bp // TB,),
        in_specs=in_specs,
        out_specs=pl.BlockSpec((TB, S, H), lambda i: (i, 0, 0)),
        compiler_params=pltpu.CompilerParams(
            dimension_semantics=("parallel",),
            vmem_limit_bytes=vmem_limit),
        cost_estimate=pl.CostEstimate(
            flops=flops,
            transcendentals=transcendentals,
            bytes_accessed=bytes_accessed),
    )(x_p, *plist)

    return out if Bp == B else out[:B]


# --------------------------- pure-JAX reference --------------------------------

def dwt_mixer_reference(x, p):
    """Unpadded f32 reference (same math as the kernel, natural layouts)."""

    def ln(v, g, b, eps=1e-5):
        mu = jnp.mean(v, -1, keepdims=True)
        d = v - mu
        var = jnp.mean(d * d, -1, keepdims=True)
        return d * jax.lax.rsqrt(var + eps) * g + b

    h = jnp.einsum('bsf,fh->bsh', x, p["wb"]) + p["bb"]
    y = ln(h, p["ln1g"], p["ln1b"])
    yt = jnp.swapaxes(y, -1, -2)                                   # (B, H, S)
    t = _gelu(jnp.einsum('bhs,sd->bhd', yt, p["wt1"]) + p["bt1"])
    t = jnp.einsum('bhd,ds->bhs', t, p["wt2"]) + p["bt2"]
    h = h + jnp.swapaxes(t, -1, -2)
    z = ln(h, p["ln2g"], p["ln2b"])
    c = _gelu(jnp.einsum('bsh,hd->bsd', z, p["wc1"]) + p["bc1"])
    c = jnp.einsum('bsd,dh->bsh', c, p["wc2"]) + p["bc2"]
    return h + c


# -------------------------------- main -----------------------------------------

def make_params(key, feature_size, hidden_dim, seq_len, tok_dim, ch_dim):
    ks = jax.random.split(key, 12)
    f32 = jnp.float32

    def init(k, shape, fan_in):
        return jax.random.normal(k, shape, f32) / jnp.sqrt(f32(fan_in))

    def small(k, shape):
        return 0.1 * jax.random.normal(k, shape, f32)

    return {
        # bottleneck Linear (stored as (in, out); equivalent to torch W.T)
        "wb":  init(ks[0], (feature_size, hidden_dim), feature_size),
        "bb":  small(ks[1], (1, hidden_dim)),
        # token-mixing LayerNorm + MLP
        "ln1g": 1.0 + small(ks[2], (1, hidden_dim)),
        "ln1b": small(ks[3], (1, hidden_dim)),
        "wt1": init(ks[4], (seq_len, tok_dim), seq_len),
        "bt1": small(ks[5], (1, tok_dim)),
        "wt2": init(ks[6], (tok_dim, seq_len), tok_dim),
        "bt2": small(ks[7], (1, seq_len)),
        # channel-mixing LayerNorm + MLP
        "ln2g": 1.0 + small(ks[8], (1, hidden_dim)),
        "ln2b": small(ks[9], (1, hidden_dim)),
        "wc1": init(ks[10], (hidden_dim, ch_dim), hidden_dim),
        "bc1": small(ks[11], (1, ch_dim)),
        "wc2": init(ks[0], (ch_dim, hidden_dim), ch_dim),
        "bc2": small(ks[1], (1, hidden_dim)),
    }


if __name__ == "__main__":
    B, S, F, H = 2, 8, 32, 32          # batch, seq, feature_size, hidden_dim
    TOK_DIM, CH_DIM = 16, 64           # token / channel MLP widths

    key = jax.random.PRNGKey(0)
    k_x, k_p = jax.random.split(key)
    x = jax.random.normal(k_x, (B, S, F), jnp.float32)
    params = make_params(k_p, F, H, S, TOK_DIM, CH_DIM)

    prepped, hidden = prepare_params(params)   # one-time weight layout prep
    out = jax.block_until_ready(dwt_mixer_forward(x, prepped, hidden_real=hidden))
    ref = dwt_mixer_reference(x, params)

    assert out.shape == (B, S, H), out.shape
    max_err = float(jnp.max(jnp.abs(out - ref)))
    # f32 math on both sides; tolerance covers MXU accumulation-order /
    # bf16-pass differences on real hardware.
    assert jnp.allclose(out, ref, atol=2e-2, rtol=2e-2), max_err

    print("KERNEL_OK")
</pallas_src>

<mosaic_0001>
module attributes {stable_mosaic.version = 11 : i64} {
  func.func @dwt_mixer_kernel(%arg0: i32, %arg1: memref<1x8x32xf32, #tpu.memory_space<vmem>>, %arg2: memref<32x128xf32, #tpu.memory_space<vmem>>, %arg3: memref<1x128xf32, #tpu.memory_space<vmem>>, %arg4: memref<1x128xf32, #tpu.memory_space<vmem>>, %arg5: memref<1x128xf32, #tpu.memory_space<vmem>>, %arg6: memref<16x8xf32, #tpu.memory_space<vmem>>, %arg7: memref<16x1xf32, #tpu.memory_space<vmem>>, %arg8: memref<8x16xf32, #tpu.memory_space<vmem>>, %arg9: memref<8x1xf32, #tpu.memory_space<vmem>>, %arg10: memref<1x128xf32, #tpu.memory_space<vmem>>, %arg11: memref<1x128xf32, #tpu.memory_space<vmem>>, %arg12: memref<128x128xf32, #tpu.memory_space<vmem>>, %arg13: memref<1x128xf32, #tpu.memory_space<vmem>>, %arg14: memref<128x128xf32, #tpu.memory_space<vmem>>, %arg15: memref<1x128xf32, #tpu.memory_space<vmem>>, %arg16: memref<1x8x32xf32, #tpu.memory_space<vmem>>) attributes {dimension_semantics = [#tpu.dimension_semantics<parallel>], iteration_bounds = array<i64: 2>, scalar_prefetch = 0 : i64, scratch_operands = 0 : i64, tpu.core_type = #tpu.core_type<tc>, window_params = [{transform_indices = @transform_0, window_bounds = array<i64: 1, 8, 32>}, {pipeline_mode = #tpu.pipeline_mode<synchronous>, transform_indices = @transform_1, window_bounds = array<i64: 32, 128>}, {pipeline_mode = #tpu.pipeline_mode<synchronous>, transform_indices = @transform_2, window_bounds = array<i64: 1, 128>}, {pipeline_mode = #tpu.pipeline_mode<synchronous>, transform_indices = @transform_3, window_bounds = array<i64: 1, 128>}, {pipeline_mode = #tpu.pipeline_mode<synchronous>, transform_indices = @transform_4, window_bounds = array<i64: 1, 128>}, {pipeline_mode = #tpu.pipeline_mode<synchronous>, transform_indices = @transform_5, window_bounds = array<i64: 16, 8>}, {pipeline_mode = #tpu.pipeline_mode<synchronous>, transform_indices = @transform_6, window_bounds = array<i64: 16, 1>}, {pipeline_mode = #tpu.pipeline_mode<synchronous>, transform_indices = @transform_7, window_bounds = array<i64: 8, 16>}, {pipeline_mode = #tpu.pipeline_mode<synchronous>, transform_indices = @transform_8, window_bounds = array<i64: 8, 1>}, {pipeline_mode = #tpu.pipeline_mode<synchronous>, transform_indices = @transform_9, window_bounds = array<i64: 1, 128>}, {pipeline_mode = #tpu.pipeline_mode<synchronous>, transform_indices = @transform_10, window_bounds = array<i64: 1, 128>}, {pipeline_mode = #tpu.pipeline_mode<synchronous>, transform_indices = @transform_11, window_bounds = array<i64: 128, 128>}, {pipeline_mode = #tpu.pipeline_mode<synchronous>, transform_indices = @transform_12, window_bounds = array<i64: 1, 128>}, {pipeline_mode = #tpu.pipeline_mode<synchronous>, transform_indices = @transform_13, window_bounds = array<i64: 128, 128>}, {pipeline_mode = #tpu.pipeline_mode<synchronous>, transform_indices = @transform_14, window_bounds = array<i64: 1, 128>}, {transform_indices = @transform_15, window_bounds = array<i64: 1, 8, 32>}]} {
    %0 = tpu.iota {dimensions = array<i32: 1>} : vector<1x128xi32>
    %c32_i32 = arith.constant 32 : i32
    %1 = vector.broadcast %c32_i32 : i32 to vector<1x128xi32>
    %2 = arith.cmpi slt, %0, %1 : vector<1x128xi32>
    %3 = arith.extui %2 : vector<1x128xi1> to vector<1x128xi32>
    %4 = arith.sitofp %3 : vector<1x128xi32> to vector<1x128xf32>
    %c0 = arith.constant 0 : index
    %c0_0 = arith.constant 0 : index
    %c0_1 = arith.constant 0 : index
    %5 = vector.load %arg1[%c0, %c0_0, %c0_1] : memref<1x8x32xf32, #tpu.memory_space<vmem>>, vector<1x8x32xf32>
    %6 = vector.shape_cast %5 : vector<1x8x32xf32> to vector<8x32xf32>
    %c0_2 = arith.constant 0 : index
    %c0_3 = arith.constant 0 : index
    %7 = vector.load %arg2[%c0_2, %c0_3] : memref<32x128xf32, #tpu.memory_space<vmem>>, vector<32x128xf32>
    %cst = arith.constant dense<0.000000e+00> : vector<8x128xf32>
    %8 = tpu.matmul %6, %7, %cst {dimension_numbers = #tpu.dot_dimension_numbers<[1], [0], [0], [1], [0, 0, 1, 1], [], []>} : vector<8x32xf32>, vector<32x128xf32>, vector<8x128xf32> -> vector<8x128xf32>
    %c0_4 = arith.constant 0 : index
    %c0_5 = arith.constant 0 : index
    %9 = vector.load %arg3[%c0_4, %c0_5] : memref<1x128xf32, #tpu.memory_space<vmem>>, vector<1x128xf32>
    %10 = vector.broadcast %9 : vector<1x128xf32> to vector<8x128xf32>
    %11 = arith.addf %8, %10 : vector<8x128xf32>
    %c0_6 = arith.constant 0 : index
    %c0_7 = arith.constant 0 : index
    %12 = vector.load %arg4[%c0_6, %c0_7] : memref<1x128xf32, #tpu.memory_space<vmem>>, vector<1x128xf32>
    %c0_8 = arith.constant 0 : index
    %c0_9 = arith.constant 0 : index
    %13 = vector.load %arg5[%c0_8, %c0_9] : memref<1x128xf32, #tpu.memory_space<vmem>>, vector<1x128xf32>
    %cst_10 = arith.constant dense<0.000000e+00> : vector<8xf32>
    %14 = vector.multi_reduction <add>, %11, %cst_10 [1] : vector<8x128xf32> to vector<8xf32>
    %15 = vector.shape_cast %14 : vector<8xf32> to vector<8x1xf32>
    %cst_11 = arith.constant 3.200000e+01 : f32
    %16 = vector.broadcast %cst_11 : f32 to vector<8x1xf32>
    %17 = arith.divf %15, %16 : vector<8x1xf32>
    %18 = vector.broadcast %17 : vector<8x1xf32> to vector<8x128xf32>
    %19 = arith.subf %11, %18 : vector<8x128xf32>
    %20 = vector.broadcast %4 : vector<1x128xf32> to vector<8x128xf32>
    %21 = arith.mulf %19, %20 : vector<8x128xf32>
    %22 = arith.mulf %21, %21 : vector<8x128xf32>
    %cst_12 = arith.constant dense<0.000000e+00> : vector<8xf32>
    %23 = vector.multi_reduction <add>, %22, %cst_12 [1] : vector<8x128xf32> to vector<8xf32>
    %24 = vector.shape_cast %23 : vector<8xf32> to vector<8x1xf32>
    %cst_13 = arith.constant 3.200000e+01 : f32
    %25 = vector.broadcast %cst_13 : f32 to vector<8x1xf32>
    %26 = arith.divf %24, %25 : vector<8x1xf32>
    %cst_14 = arith.constant 9.99999974E-6 : f32
    %27 = vector.broadcast %cst_14 : f32 to vector<8x1xf32>
    %28 = arith.addf %26, %27 : vector<8x1xf32>
    %29 = math.rsqrt %28 : vector<8x1xf32>
    %30 = vector.broadcast %29 : vector<8x1xf32> to vector<8x128xf32>
    %31 = arith.mulf %21, %30 : vector<8x128xf32>
    %32 = vector.broadcast %12 : vector<1x128xf32> to vector<8x128xf32>
    %33 = arith.mulf %31, %32 : vector<8x128xf32>
    %34 = vector.broadcast %13 : vector<1x128xf32> to vector<8x128xf32>
    %35 = arith.addf %33, %34 : vector<8x128xf32>
    %36 = vector.shape_cast %35 : vector<8x128xf32> to vector<1x8x128xf32>
    %37 = tpu.transpose %36, [1, 0, 2] : vector<1x8x128xf32> -> vector<8x1x128xf32>
    %38 = vector.shape_cast %37 : vector<8x1x128xf32> to vector<8x128xf32>
    %c0_15 = arith.constant 0 : index
    %c0_16 = arith.constant 0 : index
    %39 = vector.load %arg6[%c0_15, %c0_16] : memref<16x8xf32, #tpu.memory_space<vmem>>, vector<16x8xf32>
    %cst_17 = arith.constant dense<0.000000e+00> : vector<16x128xf32>
    %40 = tpu.matmul %39, %38, %cst_17 {dimension_numbers = #tpu.dot_dimension_numbers<[1], [0], [0], [1], [0, 0, 1, 1], [], []>} : vector<16x8xf32>, vector<8x128xf32>, vector<16x128xf32> -> vector<16x128xf32>
    %c0_18 = arith.constant 0 : index
    %c0_19 = arith.constant 0 : index
    %41 = vector.load %arg7[%c0_18, %c0_19] : memref<16x1xf32, #tpu.memory_space<vmem>>, vector<16x1xf32>
    %42 = vector.broadcast %41 : vector<16x1xf32> to vector<16x128xf32>
    %43 = arith.addf %40, %42 : vector<16x128xf32>
    %44 = arith.mulf %43, %43 : vector<16x128xf32>
    %45 = arith.mulf %43, %44 : vector<16x128xf32>
    %cst_20 = arith.constant 4.471500e-02 : f32
    %46 = vector.broadcast %cst_20 : f32 to vector<16x128xf32>
    %47 = arith.mulf %46, %45 : vector<16x128xf32>
    %48 = arith.addf %43, %47 : vector<16x128xf32>
    %cst_21 = arith.constant 0.797884583 : f32
    %49 = vector.broadcast %cst_21 : f32 to vector<16x128xf32>
    %50 = arith.mulf %49, %48 : vector<16x128xf32>
    %51 = math.tanh %50 : vector<16x128xf32>
    %cst_22 = arith.constant 1.000000e+00 : f32
    %52 = vector.broadcast %cst_22 : f32 to vector<16x128xf32>
    %53 = arith.addf %52, %51 : vector<16x128xf32>
    %cst_23 = arith.constant 5.000000e-01 : f32
    %54 = vector.broadcast %cst_23 : f32 to vector<16x128xf32>
    %55 = arith.mulf %54, %53 : vector<16x128xf32>
    %56 = arith.mulf %43, %55 : vector<16x128xf32>
    %c0_24 = arith.constant 0 : index
    %c0_25 = arith.constant 0 : index
    %57 = vector.load %arg8[%c0_24, %c0_25] : memref<8x16xf32, #tpu.memory_space<vmem>>, vector<8x16xf32>
    %cst_26 = arith.constant dense<0.000000e+00> : vector<8x128xf32>
    %58 = tpu.matmul %57, %56, %cst_26 {dimension_numbers = #tpu.dot_dimension_numbers<[1], [0], [0], [1], [0, 0, 1, 1], [], []>} : vector<8x16xf32>, vector<16x128xf32>, vector<8x128xf32> -> vector<8x128xf32>
    %c0_27 = arith.constant 0 : index
    %c0_28 = arith.constant 0 : index
    %59 = vector.load %arg9[%c0_27, %c0_28] : memref<8x1xf32, #tpu.memory_space<vmem>>, vector<8x1xf32>
    %60 = vector.broadcast %59 : vector<8x1xf32> to vector<8x128xf32>
    %61 = arith.addf %58, %60 : vector<8x128xf32>
    %62 = vector.broadcast %4 : vector<1x128xf32> to vector<8x128xf32>
    %63 = arith.mulf %61, %62 : vector<8x128xf32>
    %64 = vector.shape_cast %63 : vector<8x128xf32> to vector<8x1x128xf32>
    %65 = tpu.transpose %64, [1, 0, 2] : vector<8x1x128xf32> -> vector<1x8x128xf32>
    %66 = vector.shape_cast %65 : vector<1x8x128xf32> to vector<8x128xf32>
    %67 = arith.addf %11, %66 : vector<8x128xf32>
    %c0_29 = arith.constant 0 : index
    %c0_30 = arith.constant 0 : index
    %68 = vector.load %arg10[%c0_29, %c0_30] : memref<1x128xf32, #tpu.memory_space<vmem>>, vector<1x128xf32>
    %c0_31 = arith.constant 0 : index
    %c0_32 = arith.constant 0 : index
    %69 = vector.load %arg11[%c0_31, %c0_32] : memref<1x128xf32, #tpu.memory_space<vmem>>, vector<1x128xf32>
    %cst_33 = arith.constant dense<0.000000e+00> : vector<8xf32>
    %70 = vector.multi_reduction <add>, %67, %cst_33 [1] : vector<8x128xf32> to vector<8xf32>
    %71 = vector.shape_cast %70 : vector<8xf32> to vector<8x1xf32>
    %cst_34 = arith.constant 3.200000e+01 : f32
    %72 = vector.broadcast %cst_34 : f32 to vector<8x1xf32>
    %73 = arith.divf %71, %72 : vector<8x1xf32>
    %74 = vector.broadcast %73 : vector<8x1xf32> to vector<8x128xf32>
    %75 = arith.subf %67, %74 : vector<8x128xf32>
    %76 = vector.broadcast %4 : vector<1x128xf32> to vector<8x128xf32>
    %77 = arith.mulf %75, %76 : vector<8x128xf32>
    %78 = arith.mulf %77, %77 : vector<8x128xf32>
    %cst_35 = arith.constant dense<0.000000e+00> : vector<8xf32>
    %79 = vector.multi_reduction <add>, %78, %cst_35 [1] : vector<8x128xf32> to vector<8xf32>
    %80 = vector.shape_cast %79 : vector<8xf32> to vector<8x1xf32>
    %cst_36 = arith.constant 3.200000e+01 : f32
    %81 = vector.broadcast %cst_36 : f32 to vector<8x1xf32>
    %82 = arith.divf %80, %81 : vector<8x1xf32>
    %cst_37 = arith.constant 9.99999974E-6 : f32
    %83 = vector.broadcast %cst_37 : f32 to vector<8x1xf32>
    %84 = arith.addf %82, %83 : vector<8x1xf32>
    %85 = math.rsqrt %84 : vector<8x1xf32>
    %86 = vector.broadcast %85 : vector<8x1xf32> to vector<8x128xf32>
    %87 = arith.mulf %77, %86 : vector<8x128xf32>
    %88 = vector.broadcast %68 : vector<1x128xf32> to vector<8x128xf32>
    %89 = arith.mulf %87, %88 : vector<8x128xf32>
    %90 = vector.broadcast %69 : vector<1x128xf32> to vector<8x128xf32>
    %91 = arith.addf %89, %90 : vector<8x128xf32>
    %c0_38 = arith.constant 0 : index
    %c0_39 = arith.constant 0 : index
    %92 = vector.load %arg12[%c0_38, %c0_39] : memref<128x128xf32, #tpu.memory_space<vmem>>, vector<128x128xf32>
    %cst_40 = arith.constant dense<0.000000e+00> : vector<8x128xf32>
    %93 = tpu.matmul %91, %92, %cst_40 {dimension_numbers = #tpu.dot_dimension_numbers<[1], [0], [0], [1], [0, 0, 1, 1], [], []>} : vector<8x128xf32>, vector<128x128xf32>, vector<8x128xf32> -> vector<8x128xf32>
    %c0_41 = arith.constant 0 : index
    %c0_42 = arith.constant 0 : index
    %94 = vector.load %arg13[%c0_41, %c0_42] : memref<1x128xf32, #tpu.memory_space<vmem>>, vector<1x128xf32>
    %95 = vector.broadcast %94 : vector<1x128xf32> to vector<8x128xf32>
    %96 = arith.addf %93, %95 : vector<8x128xf32>
    %97 = arith.mulf %96, %96 : vector<8x128xf32>
    %98 = arith.mulf %96, %97 : vector<8x128xf32>
    %cst_43 = arith.constant 4.471500e-02 : f32
    %99 = vector.broadcast %cst_43 : f32 to vector<8x128xf32>
    %100 = arith.mulf %99, %98 : vector<8x128xf32>
    %101 = arith.addf %96, %100 : vector<8x128xf32>
    %cst_44 = arith.constant 0.797884583 : f32
    %102 = vector.broadcast %cst_44 : f32 to vector<8x128xf32>
    %103 = arith.mulf %102, %101 : vector<8x128xf32>
    %104 = math.tanh %103 : vector<8x128xf32>
    %cst_45 = arith.constant 1.000000e+00 : f32
    %105 = vector.broadcast %cst_45 : f32 to vector<8x128xf32>
    %106 = arith.addf %105, %104 : vector<8x128xf32>
    %cst_46 = arith.constant 5.000000e-01 : f32
    %107 = vector.broadcast %cst_46 : f32 to vector<8x128xf32>
    %108 = arith.mulf %107, %106 : vector<8x128xf32>
    %109 = arith.mulf %96, %108 : vector<8x128xf32>
    %c0_47 = arith.constant 0 : index
    %c0_48 = arith.constant 0 : index
    %110 = vector.load %arg14[%c0_47, %c0_48] : memref<128x128xf32, #tpu.memory_space<vmem>>, vector<128x128xf32>
    %cst_49 = arith.constant dense<0.000000e+00> : vector<8x128xf32>
    %111 = tpu.matmul %109, %110, %cst_49 {dimension_numbers = #tpu.dot_dimension_numbers<[1], [0], [0], [1], [0, 0, 1, 1], [], []>} : vector<8x128xf32>, vector<128x128xf32>, vector<8x128xf32> -> vector<8x128xf32>
    %c0_50 = arith.constant 0 : index
    %c0_51 = arith.constant 0 : index
    %112 = vector.load %arg15[%c0_50, %c0_51] : memref<1x128xf32, #tpu.memory_space<vmem>>, vector<1x128xf32>
    %113 = vector.broadcast %112 : vector<1x128xf32> to vector<8x128xf32>
    %114 = arith.addf %111, %113 : vector<8x128xf32>
    %115 = arith.addf %67, %114 : vector<8x128xf32>
    %116 = vector.extract_strided_slice %115 {offsets = [0, 0], sizes = [8, 32], strides = [1, 1]} : vector<8x128xf32> to vector<8x32xf32>
    %117 = vector.shape_cast %116 : vector<8x32xf32> to vector<1x8x32xf32>
    %c0_52 = arith.constant 0 : index
    %c0_53 = arith.constant 0 : index
    %c0_54 = arith.constant 0 : index
    %118 = vector.load %arg16[%c0_52, %c0_53, %c0_54] : memref<1x8x32xf32, #tpu.memory_space<vmem>>, vector<1x8x32xf32>
    tpu.vector_store %arg16[%c0_52, %c0_53, %c0_54], %117 {strides = array<i32>} : memref<1x8x32xf32, #tpu.memory_space<vmem>>, vector<1x8x32xf32>,
    return
  }
  func.func @transform_0(%arg0: i32) -> (i32, i32, i32) {
    %c0_i32 = arith.constant 0 : i32
    %c0_i32_0 = arith.constant 0 : i32
    %c0_i32_1 = arith.constant 0 : i32
    return %arg0, %c0_i32, %c0_i32_0 : i32, i32, i32
  }
  func.func @transform_1(%arg0: i32) -> (i32, i32) {
    %c0_i32 = arith.constant 0 : i32
    %c0_i32_0 = arith.constant 0 : i32
    %c0_i32_1 = arith.constant 0 : i32
    return %c0_i32, %c0_i32_0 : i32, i32
  }
  func.func @transform_2(%arg0: i32) -> (i32, i32) {
    %c0_i32 = arith.constant 0 : i32
    %c0_i32_0 = arith.constant 0 : i32
    %c0_i32_1 = arith.constant 0 : i32
    return %c0_i32, %c0_i32_0 : i32, i32
  }
  func.func @transform_3(%arg0: i32) -> (i32, i32) {
    %c0_i32 = arith.constant 0 : i32
    %c0_i32_0 = arith.constant 0 : i32
    %c0_i32_1 = arith.constant 0 : i32
    return %c0_i32, %c0_i32_0 : i32, i32
  }
  func.func @transform_4(%arg0: i32) -> (i32, i32) {
    %c0_i32 = arith.constant 0 : i32
    %c0_i32_0 = arith.constant 0 : i32
    %c0_i32_1 = arith.constant 0 : i32
    return %c0_i32, %c0_i32_0 : i32, i32
  }
  func.func @transform_5(%arg0: i32) -> (i32, i32) {
    %c0_i32 = arith.constant 0 : i32
    %c0_i32_0 = arith.constant 0 : i32
    %c0_i32_1 = arith.constant 0 : i32
    return %c0_i32, %c0_i32_0 : i32, i32
  }
  func.func @transform_6(%arg0: i32) -> (i32, i32) {
    %c0_i32 = arith.constant 0 : i32
    %c0_i32_0 = arith.constant 0 : i32
    %c0_i32_1 = arith.constant 0 : i32
    return %c0_i32, %c0_i32_0 : i32, i32
  }
  func.func @transform_7(%arg0: i32) -> (i32, i32) {
    %c0_i32 = arith.constant 0 : i32
    %c0_i32_0 = arith.constant 0 : i32
    %c0_i32_1 = arith.constant 0 : i32
    return %c0_i32, %c0_i32_0 : i32, i32
  }
  func.func @transform_8(%arg0: i32) -> (i32, i32) {
    %c0_i32 = arith.constant 0 : i32
    %c0_i32_0 = arith.constant 0 : i32
    %c0_i32_1 = arith.constant 0 : i32
    return %c0_i32, %c0_i32_0 : i32, i32
  }
  func.func @transform_9(%arg0: i32) -> (i32, i32) {
    %c0_i32 = arith.constant 0 : i32
    %c0_i32_0 = arith.constant 0 : i32
    %c0_i32_1 = arith.constant 0 : i32
    return %c0_i32, %c0_i32_0 : i32, i32
  }
  func.func @transform_10(%arg0: i32) -> (i32, i32) {
    %c0_i32 = arith.constant 0 : i32
    %c0_i32_0 = arith.constant 0 : i32
    %c0_i32_1 = arith.constant 0 : i32
    return %c0_i32, %c0_i32_0 : i32, i32
  }
  func.func @transform_11(%arg0: i32) -> (i32, i32) {
    %c0_i32 = arith.constant 0 : i32
    %c0_i32_0 = arith.constant 0 : i32
    %c0_i32_1 = arith.constant 0 : i32
    return %c0_i32, %c0_i32_0 : i32, i32
  }
  func.func @transform_12(%arg0: i32) -> (i32, i32) {
    %c0_i32 = arith.constant 0 : i32
    %c0_i32_0 = arith.constant 0 : i32
    %c0_i32_1 = arith.constant 0 : i32
    return %c0_i32, %c0_i32_0 : i32, i32
  }
  func.func @transform_13(%arg0: i32) -> (i32, i32) {
    %c0_i32 = arith.constant 0 : i32
    %c0_i32_0 = arith.constant 0 : i32
    %c0_i32_1 = arith.constant 0 : i32
    return %c0_i32, %c0_i32_0 : i32, i32
  }
  func.func @transform_14(%arg0: i32) -> (i32, i32) {
    %c0_i32 = arith.constant 0 : i32
    %c0_i32_0 = arith.constant 0 : i32
    %c0_i32_1 = arith.constant 0 : i32
    return %c0_i32, %c0_i32_0 : i32, i32
  }
  func.func @transform_15(%arg0: i32) -> (i32, i32, i32) {
    %c0_i32 = arith.constant 0 : i32
    %c0_i32_0 = arith.constant 0 : i32
    %c0_i32_1 = arith.constant 0 : i32
    return %arg0, %c0_i32, %c0_i32_0 : i32, i32, i32
  }
}

</mosaic_0001>

<llo_original>
// kernel: dwt_mixer_forward.1
$region0: #{dwt_mixer_forward.1}
  #allocation0 [shape = 'u32[]', space=smem, size = 0x4, offset = 0x4, fixed_abs, tag = 'smem constant byte address 0x4 - core index']
  #allocation1 [shape = 'u32[72,128]{1,0:T(1,128)}', space=vmem, size = 0x9000, scoped, tag = 'internal scratch']
  %s0 = inlined_call_operand.vmem [shape: f32[2,8,32], index: 0, kind: input, shape index: {}]
  %s1 = inlined_call_operand.vmem [shape: f32[32,128], index: 1, kind: input, shape index: {}]
  %s2 = inlined_call_operand.hbm [shape: f32[1,128], index: 2, kind: input, shape index: {}]
  %s3 = inlined_call_operand.hbm [shape: f32[1,128], index: 3, kind: input, shape index: {}]
  %s4 = inlined_call_operand.hbm [shape: f32[1,128], index: 4, kind: input, shape index: {}]
  %s5 = inlined_call_operand.vmem [shape: f32[16,8], index: 5, kind: input, shape index: {}]
  %s6 = inlined_call_operand.vmem [shape: f32[16,1], index: 6, kind: input, shape index: {}]
  %s7 = inlined_call_operand.vmem [shape: f32[8,16], index: 7, kind: input, shape index: {}]
  %s8 = inlined_call_operand.vmem [shape: f32[8,1], index: 8, kind: input, shape index: {}]
  %s9 = inlined_call_operand.vmem [shape: f32[1,128], index: 9, kind: input, shape index: {}]
  %s10 = inlined_call_operand.vmem [shape: f32[1,128], index: 10, kind: input, shape index: {}]
  %s11 = inlined_call_operand.hbm [shape: f32[128,128], index: 11, kind: input, shape index: {}]
  %s12 = inlined_call_operand.vmem [shape: f32[1,128], index: 12, kind: input, shape index: {}]
  %s13 = inlined_call_operand.hbm [shape: f32[128,128], index: 13, kind: input, shape index: {}]
  %s14 = inlined_call_operand.vmem [shape: f32[1,128], index: 14, kind: input, shape index: {}]
  %s15 = inlined_call_operand.hbm [shape: f32[2,8,32], index: 15, kind: output, shape index: {}]
  %s16 = sld [smem:[#allocation0]]
  $region113: #{dwt_mixer_forward.1} parent=0
    _
  %s18 = ssub.s32 1, %s16
  %s19 = scalar_select 0, %s18, %s16
  $region1: #{dwt_mixer_forward.1} parent=0
    #allocation2 [shape = 'u8[512]{0}', space=vmem, size = 0x400, scoped, tag = 'input window, operand 2, single buffered']
    #allocation3 [shape = 's32[2]{0}', space=sflag, size = 0x8, scoped, tag = 'scoped memory for dwt_mixer_forward.1']
    #allocation4 [shape = 's32[2]{0}', space=sflag, size = 0x8, scoped, tag = 'scoped memory for dwt_mixer_forward.1']
    #allocation5 [shape = 'u8[512]{0}', space=vmem, size = 0x400, scoped, tag = 'input window, operand 3, single buffered']
    #allocation6 [shape = 's32[1]{0}', space=sflag, size = 0x4, scoped, tag = 'scoped memory for dwt_mixer_forward.1']
    #allocation7 [shape = 'u8[512]{0}', space=vmem, size = 0x400, scoped, tag = 'input window, operand 4, single buffered']
    #allocation8 [shape = 'u8[65536]{0}', space=vmem, size = 0x10000, scoped, tag = 'input window, operand 11, single buffered']
    #allocation9 [shape = 's32[1]{0}', space=sflag, size = 0x4, scoped, tag = 'scoped memory for dwt_mixer_forward.1']
    #allocation10 [shape = 'u8[65536]{0}', space=vmem, size = 0x10000, scoped, tag = 'input window, operand 13, single buffered']
    #allocation11 [shape = 'u8[8192]{0}', space=vmem, size = 0x2000, scoped, tag = 'output window, operand 0']
    %20 = vsyncpa [#allocation3], 0
    %21 = vsyncpa [#allocation6], 0
    %22 = vsyncpa [#allocation9], 0
    %23 = vsyncpa [#allocation4], 0
    %s24 = scalar_lea.sflag [#allocation4], 1
    %25 = vsyncpa %s24, 0
    loop: start=0, step=1, limit=4
    $region2: #{dwt_mixer_forward.1} parent=1 // loop_pre_header
      _
    $region3: #{dwt_mixer_forward.1} parent=1 // loop_header
      %s27 = sphi 0, %s31
      %p28 = scmp.ge.s32.totalorder %s27, 4
      %s37 = sphi 0, %s39
      %s40 = sphi 0, %s37
      %s41 = sphi 0, %s40
      %s57 = sphi 0, %s41
      %s61 = sphi 0, %s61
      %s63 = sphi 0, %s61
      %s64 = sphi 0, %s63
      %s78 = sphi 0, %s64
      %s82 = sphi 0, %s82
      %s84 = sphi 0, %s82
      %s85 = sphi 0, %s84
      %s99 = sphi 0, %s85
      %s103 = sphi 0, %s103
      %s105 = sphi 0, %s103
      %s106 = sphi 0, %s105
      %s120 = sphi 0, %s106
      %s124 = sphi 0, %s124
      %s126 = sphi 0, %s124
      %s127 = sphi 0, %s126
      %s141 = sphi 0, %s127
      %s145 = sphi 0, %s145
      %s147 = sphi 0, %s145
      %s148 = sphi 0, %s147
      %s162 = sphi 0, %s148
      %s166 = sphi 0, %s166
      %s168 = sphi 0, %s166
      %s169 = sphi 0, %s168
      %s183 = sphi 0, %s169
      %s187 = sphi 0, %s187
      %s189 = sphi 0, %s187
      %s190 = sphi 0, %s189
      %s204 = sphi 0, %s190
      %s208 = sphi 0, %s208
      %s210 = sphi 0, %s208
      %s211 = sphi 0, %s210
      %s225 = sphi 0, %s211
      %s229 = sphi 0, %s229
      %s231 = sphi 0, %s229
      %s232 = sphi 0, %s231
      %s246 = sphi 0, %s232
      %s250 = sphi 0, %s250
      %s252 = sphi 0, %s250
      %s253 = sphi 0, %s252
      %s267 = sphi 0, %s253
      %s271 = sphi 0, %s271
      %s273 = sphi 0, %s271
      %s274 = sphi 0, %s273
      %s288 = sphi 0, %s274
      %s292 = sphi 0, %s292
      %s294 = sphi 0, %s292
      %s295 = sphi 0, %s294
      %s309 = sphi 0, %s295
      %s313 = sphi 0, %s313
      %s315 = sphi 0, %s313
      %s316 = sphi 0, %s315
      %s330 = sphi 0, %s316
      %s334 = sphi 0, %s334
      %s336 = sphi 0, %s334
      %s337 = sphi 0, %s336
      %s351 = sphi 0, %s337
      %s357 = sphi 0, %s359
      %s360 = sphi 0, %s357
      %s361 = sphi 0, %s360
      %s377 = sphi 0, %s361
    $region4: #{dwt_mixer_forward.1} parent=1 // loop_header_branch
      %30 = sbr.rel (%p28) target = $region8
    $region5: #{dwt_mixer_forward.1} parent=1 // loop_body
      %s32 = ssub.s32 %s27, 1
      %s33 = ssub.s32 %s27, 2
      %s34 = sadd.s32 %s27, 1
      %s35 = ssub.s32 %s27, %s34
      %p36 = scmp.eq.s32.totalorder %s35, 0
      %s38 = sadd.s32 %s37, 1
      %s39 = scalar_select %p36, %s37, %s38
      %p42 = pneg %p36
      %p43 = scmp.eq.s32.totalorder %s27, 1
      %p44 = por %p42, %p43
      %p45 = scmp.ne.s32.totalorder %s37, %s40
      %p46 = scmp.eq.s32.totalorder %s27, 0
      %p47 = por %p45, %p46
      %p48 = scmp.ne.s32.totalorder %s37, %s40
      %p49 = scmp.eq.s32.totalorder %s32, 1
      %p50 = por %p48, %p49
      %p51 = scmp.ne.s32.totalorder %s40, %s41
      %p52 = scmp.eq.s32.totalorder %s32, 0
      %p53 = por %p51, %p52
      %p54 = scmp.ne.s32.totalorder %s40, %s41
      %p55 = scmp.eq.s32.totalorder %s33, 1
      %p56 = por %p54, %p55
      %p58 = scmp.ne.s32.totalorder %s41, %s57
      %p59 = scmp.eq.s32.totalorder %s33, 0
      %p60 = por %p58, %p59
      %s62 = sadd.s32 %s61, 1
      %p65 = scmp.eq.s32.totalorder %s27, 1
      %p66 = scmp.ne.s32.totalorder %s61, %s63
      %p67 = scmp.eq.s32.totalorder %s27, 0
      %p68 = por %p66, %p67
      %p69 = scmp.ne.s32.totalorder %s61, %s63
      %p70 = scmp.eq.s32.totalorder %s32, 1
      %p71 = por %p69, %p70
      %p72 = scmp.ne.s32.totalorder %s63, %s64
      %p73 = scmp.eq.s32.totalorder %s32, 0
      %p74 = por %p72, %p73
      %p75 = scmp.ne.s32.totalorder %s63, %s64
      %p76 = scmp.eq.s32.totalorder %s33, 1
      %p77 = por %p75, %p76
      %p79 = scmp.ne.s32.totalorder %s64, %s78
      %p80 = scmp.eq.s32.totalorder %s33, 0
      %p81 = por %p79, %p80
      %s83 = sadd.s32 %s82, 1
      %p86 = scmp.eq.s32.totalorder %s27, 1
      %p87 = scmp.ne.s32.totalorder %s82, %s84
      %p88 = scmp.eq.s32.totalorder %s27, 0
      %p89 = por %p87, %p88
      %p90 = scmp.ne.s32.totalorder %s82, %s84
      %p91 = scmp.eq.s32.totalorder %s32, 1
      %p92 = por %p90, %p91
      %p93 = scmp.ne.s32.totalorder %s84, %s85
      %p94 = scmp.eq.s32.totalorder %s32, 0
      %p95 = por %p93, %p94
      %p96 = scmp.ne.s32.totalorder %s84, %s85
      %p97 = scmp.eq.s32.totalorder %s33, 1
      %p98 = por %p96, %p97
      %p100 = scmp.ne.s32.totalorder %s85, %s99
      %p101 = scmp.eq.s32.totalorder %s33, 0
      %p102 = por %p100, %p101
      %s104 = sadd.s32 %s103, 1
      %p107 = scmp.eq.s32.totalorder %s27, 1
      %p108 = scmp.ne.s32.totalorder %s103, %s105
      %p109 = scmp.eq.s32.totalorder %s27, 0
      %p110 = por %p108, %p109
      %p111 = scmp.ne.s32.totalorder %s103, %s105
      %p112 = scmp.eq.s32.totalorder %s32, 1
      %p113 = por %p111, %p112
      %p114 = scmp.ne.s32.totalorder %s105, %s106
      %p115 = scmp.eq.s32.totalorder %s32, 0
      %p116 = por %p114, %p115
      %p117 = scmp.ne.s32.totalorder %s105, %s106
      %p118 = scmp.eq.s32.totalorder %s33, 1
      %p119 = por %p117, %p118
      %p121 = scmp.ne.s32.totalorder %s106, %s120
      %p122 = scmp.eq.s32.totalorder %s33, 0
      %p123 = por %p121, %p122
      %s125 = sadd.s32 %s124, 1
      %p128 = scmp.eq.s32.totalorder %s27, 1
      %p129 = scmp.ne.s32.totalorder %s124, %s126
      %p130 = scmp.eq.s32.totalorder %s27, 0
      %p131 = por %p129, %p130
      %p132 = scmp.ne.s32.totalorder %s124, %s126
      %p133 = scmp.eq.s32.totalorder %s32, 1
      %p134 = por %p132, %p133
      %p135 = scmp.ne.s32.totalorder %s126, %s127
      %p136 = scmp.eq.s32.totalorder %s32, 0
      %p137 = por %p135, %p136
      %p138 = scmp.ne.s32.totalorder %s126, %s127
      %p139 = scmp.eq.s32.totalorder %s33, 1
      %p140 = por %p138, %p139
      %p142 = scmp.ne.s32.totalorder %s127, %s141
      %p143 = scmp.eq.s32.totalorder %s33, 0
      %p144 = por %p142, %p143
      %s146 = sadd.s32 %s145, 1
      %p149 = scmp.eq.s32.totalorder %s27, 1
      %p150 = scmp.ne.s32.totalorder %s145, %s147
      %p151 = scmp.eq.s32.totalorder %s27, 0
      %p152 = por %p150, %p151
      %p153 = scmp.ne.s32.totalorder %s145, %s147
      %p154 = scmp.eq.s32.totalorder %s32, 1
      %p155 = por %p153, %p154
      %p156 = scmp.ne.s32.totalorder %s147, %s148
      %p157 = scmp.eq.s32.totalorder %s32, 0
      %p158 = por %p156, %p157
      %p159 = scmp.ne.s32.totalorder %s147, %s148
      %p160 = scmp.eq.s32.totalorder %s33, 1
      %p161 = por %p159, %p160
      %p163 = scmp.ne.s32.totalorder %s148, %s162
      %p164 = scmp.eq.s32.totalorder %s33, 0
      %p165 = por %p163, %p164
      %s167 = sadd.s32 %s166, 1
      %p170 = scmp.eq.s32.totalorder %s27, 1
      %p171 = scmp.ne.s32.totalorder %s166, %s168
      %p172 = scmp.eq.s32.totalorder %s27, 0
      %p173 = por %p171, %p172
      %p174 = scmp.ne.s32.totalorder %s166, %s168
      %p175 = scmp.eq.s32.totalorder %s32, 1
      %p176 = por %p174, %p175
      %p177 = scmp.ne.s32.totalorder %s168, %s169
      %p178 = scmp.eq.s32.totalorder %s32, 0
      %p179 = por %p177, %p178
      %p180 = scmp.ne.s32.totalorder %s168, %s169
      %p181 = scmp.eq.s32.totalorder %s33, 1
      %p182 = por %p180, %p181
      %p184 = scmp.ne.s32.totalorder %s169, %s183
      %p185 = scmp.eq.s32.totalorder %s33, 0
      %p186 = por %p184, %p185
      %s188 = sadd.s32 %s187, 1
      %p191 = scmp.eq.s32.totalorder %s27, 1
      %p192 = scmp.ne.s32.totalorder %s187, %s189
      %p193 = scmp.eq.s32.totalorder %s27, 0
      %p194 = por %p192, %p193
      %p195 = scmp.ne.s32.totalorder %s187, %s189
      %p196 = scmp.eq.s32.totalorder %s32, 1
      %p197 = por %p195, %p196
      %p198 = scmp.ne.s32.totalorder %s189, %s190
      %p199 = scmp.eq.s32.totalorder %s32, 0
      %p200 = por %p198, %p199
      %p201 = scmp.ne.s32.totalorder %s189, %s190
      %p202 = scmp.eq.s32.totalorder %s33, 1
      %p203 = por %p201, %p202
      %p205 = scmp.ne.s32.totalorder %s190, %s204
      %p206 = scmp.eq.s32.totalorder %s33, 0
      %p207 = por %p205, %p206
      %s209 = sadd.s32 %s208, 1
      %p212 = scmp.eq.s32.totalorder %s27, 1
      %p213 = scmp.ne.s32.totalorder %s208, %s210
      %p214 = scmp.eq.s32.totalorder %s27, 0
      %p215 = por %p213, %p214
      %p216 = scmp.ne.s32.totalorder %s208, %s210
      %p217 = scmp.eq.s32.totalorder %s32, 1
      %p218 = por %p216, %p217
      %p219 = scmp.ne.s32.totalorder %s210, %s211
      %p220 = scmp.eq.s32.totalorder %s32, 0
      %p221 = por %p219, %p220
      %p222 = scmp.ne.s32.totalorder %s210, %s211
      %p223 = scmp.eq.s32.totalorder %s33, 1
      %p224 = por %p222, %p223
      %p226 = scmp.ne.s32.totalorder %s211, %s225
      %p227 = scmp.eq.s32.totalorder %s33, 0
      %p228 = por %p226, %p227
      %s230 = sadd.s32 %s229, 1
      %p233 = scmp.eq.s32.totalorder %s27, 1
      %p234 = scmp.ne.s32.totalorder %s229, %s231
      %p235 = scmp.eq.s32.totalorder %s27, 0
      %p236 = por %p234, %p235
      %p237 = scmp.ne.s32.totalorder %s229, %s231
      %p238 = scmp.eq.s32.totalorder %s32, 1
      %p239 = por %p237, %p238
      %p240 = scmp.ne.s32.totalorder %s231, %s232
      %p241 = scmp.eq.s32.totalorder %s32, 0
      %p242 = por %p240, %p241
      %p243 = scmp.ne.s32.totalorder %s231, %s232
      %p244 = scmp.eq.s32.totalorder %s33, 1
      %p245 = por %p243, %p244
      %p247 = scmp.ne.s32.totalorder %s232, %s246
      %p248 = scmp.eq.s32.totalorder %s33, 0
      %p249 = por %p247, %p248
      %s251 = sadd.s32 %s250, 1
      %p254 = scmp.eq.s32.totalorder %s27, 1
      %p255 = scmp.ne.s32.totalorder %s250, %s252
      %p256 = scmp.eq.s32.totalorder %s27, 0
      %p257 = por %p255, %p256
      %p258 = scmp.ne.s32.totalorder %s250, %s252
      %p259 = scmp.eq.s32.totalorder %s32, 1
      %p260 = por %p258, %p259
      %p261 = scmp.ne.s32.totalorder %s252, %s253
      %p262 = scmp.eq.s32.totalorder %s32, 0
      %p263 = por %p261, %p262
      %p264 = scmp.ne.s32.totalorder %s252, %s253
      %p265 = scmp.eq.s32.totalorder %s33, 1
      %p266 = por %p264, %p265
      %p268 = scmp.ne.s32.totalorder %s253, %s267
      %p269 = scmp.eq.s32.totalorder %s33, 0
      %p270 = por %p268, %p269
      %s272 = sadd.s32 %s271, 1
      %p275 = scmp.eq.s32.totalorder %s27, 1
      %p276 = scmp.ne.s32.totalorder %s271, %s273
      %p277 = scmp.eq.s32.totalorder %s27, 0
      %p278 = por %p276, %p277
      %p279 = scmp.ne.s32.totalorder %s271, %s273
      %p280 = scmp.eq.s32.totalorder %s32, 1
      %p281 = por %p279, %p280
      %p282 = scmp.ne.s32.totalorder %s273, %s274
      %p283 = scmp.eq.s32.totalorder %s32, 0
      %p284 = por %p282, %p283
      %p285 = scmp.ne.s32.totalorder %s273, %s274
      %p286 = scmp.eq.s32.totalorder %s33, 1
      %p287 = por %p285, %p286
      %p289 = scmp.ne.s32.totalorder %s274, %s288
      %p290 = scmp.eq.s32.totalorder %s33, 0
      %p291 = por %p289, %p290
      %s293 = sadd.s32 %s292, 1
      %p296 = scmp.eq.s32.totalorder %s27, 1
      %p297 = scmp.ne.s32.totalorder %s292, %s294
      %p298 = scmp.eq.s32.totalorder %s27, 0
      %p299 = por %p297, %p298
      %p300 = scmp.ne.s32.totalorder %s292, %s294
      %p301 = scmp.eq.s32.totalorder %s32, 1
      %p302 = por %p300, %p301
      %p303 = scmp.ne.s32.totalorder %s294, %s295
      %p304 = scmp.eq.s32.totalorder %s32, 0
      %p305 = por %p303, %p304
      %p306 = scmp.ne.s32.totalorder %s294, %s295
      %p307 = scmp.eq.s32.totalorder %s33, 1
      %p308 = por %p306, %p307
      %p310 = scmp.ne.s32.totalorder %s295, %s309
      %p311 = scmp.eq.s32.totalorder %s33, 0
      %p312 = por %p310, %p311
      %s314 = sadd.s32 %s313, 1
      %p317 = scmp.eq.s32.totalorder %s27, 1
      %p318 = scmp.ne.s32.totalorder %s313, %s315
      %p319 = scmp.eq.s32.totalorder %s27, 0
      %p320 = por %p318, %p319
      %p321 = scmp.ne.s32.totalorder %s313, %s315
      %p322 = scmp.eq.s32.totalorder %s32, 1
      %p323 = por %p321, %p322
      %p324 = scmp.ne.s32.totalorder %s315, %s316
      %p325 = scmp.eq.s32.totalorder %s32, 0
      %p326 = por %p324, %p325
      %p327 = scmp.ne.s32.totalorder %s315, %s316
      %p328 = scmp.eq.s32.totalorder %s33, 1
      %p329 = por %p327, %p328
      %p331 = scmp.ne.s32.totalorder %s316, %s330
      %p332 = scmp.eq.s32.totalorder %s33, 0
      %p333 = por %p331, %p332
      %s335 = sadd.s32 %s334, 1
      %p338 = scmp.eq.s32.totalorder %s27, 1
      %p339 = scmp.ne.s32.totalorder %s334, %s336
      %p340 = scmp.eq.s32.totalorder %s27, 0
      %p341 = por %p339, %p340
      %p342 = scmp.ne.s32.totalorder %s334, %s336
      %p343 = scmp.eq.s32.totalorder %s32, 1
      %p344 = por %p342, %p343
      %p345 = scmp.ne.s32.totalorder %s336, %s337
      %p346 = scmp.eq.s32.totalorder %s32, 0
      %p347 = por %p345, %p346
      %p348 = scmp.ne.s32.totalorder %s336, %s337
      %p349 = scmp.eq.s32.totalorder %s33, 1
      %p350 = por %p348, %p349
      %p352 = scmp.ne.s32.totalorder %s337, %s351
      %p353 = scmp.eq.s32.totalorder %s33, 0
      %p354 = por %p352, %p353
      %s355 = ssub.s32 %s27, %s34
      %p356 = scmp.eq.s32.totalorder %s355, 0
      %s358 = sadd.s32 %s357, 1
      %s359 = scalar_select %p356, %s357, %s358
      %p362 = pneg %p356
      %p363 = scmp.eq.s32.totalorder %s27, 1
      %p364 = por %p362, %p363
      %p365 = scmp.ne.s32.totalorder %s357, %s360
      %p366 = scmp.eq.s32.totalorder %s27, 0
      %p367 = por %p365, %p366
      %p368 = scmp.ne.s32.totalorder %s357, %s360
      %p369 = scmp.eq.s32.totalorder %s32, 1
      %p370 = por %p368, %p369
      %p371 = scmp.ne.s32.totalorder %s360, %s361
      %p372 = scmp.eq.s32.totalorder %s32, 0
      %p373 = por %p371, %p372
      %p374 = scmp.ne.s32.totalorder %s360, %s361
      %p375 = scmp.eq.s32.totalorder %s33, 1
      %p376 = por %p374, %p375
      %p378 = scmp.ne.s32.totalorder %s361, %s377
      %p379 = scmp.eq.s32.totalorder %s33, 0
      %p380 = por %p378, %p379
      %p381 = scmp.le.s32.totalorder 1, %s27
      %p382 = scmp.lt.s32.totalorder %s27, 3
      %p383 = pnand %p381, %p382
      %p384 = pneg %p383
      // Predicated region
      $region9: #{dwt_mixer_forward.1} parent=5 // pred_check
        _
      $region10: #{dwt_mixer_forward.1} parent=5 // pred_check_branch
        %386 = sbr.rel (%p383) target = $region12
      $region11: #{dwt_mixer_forward.1} parent=5 // pred_region
        %s387 = ssub.s32 %s27, 1
        // Predicated region
        $region13: #{dwt_mixer_forward.1} parent=11 // pred_check
          %p388 = pneg %p74
        $region14: #{dwt_mixer_forward.1} parent=11 // pred_check_branch
          %390 = sbr.rel (%p388) target = $region16
        $region15: #{dwt_mixer_forward.1} parent=11 // pred_region
          _
        $region16: #{dwt_mixer_forward.1} parent=11 // pred_fallthru
          _
        // Predicated region
        $region17: #{dwt_mixer_forward.1} parent=11 // pred_check
          %p391 = pneg %p95
        $region18: #{dwt_mixer_forward.1} parent=11 // pred_check_branch
          %393 = sbr.rel (%p391) target = $region20
        $region19: #{dwt_mixer_forward.1} parent=11 // pred_region
          %395 = vsyncadd [#allocation3], 0
          %s397 = sshll.u32 %s2, 4
          %s398 = int_to_ptr.hbm [resolvable:$true] %s397
          %s399 = sshll.u32 [#allocation2], 4
          %s400 = int_to_ptr.vmem [resolvable:$true] %s399
          %402 = dma.hbm_to_vmem [thread:$0]  %s398, 16, %s400, [#allocation3]
        $region20: #{dwt_mixer_forward.1} parent=11 // pred_fallthru
          _
        // Predicated region
        $region21: #{dwt_mixer_forward.1} parent=11 // pred_check
          %p403 = pneg %p116
        $region22: #{dwt_mixer_forward.1} parent=11 // pred_check_branch
          %405 = sbr.rel (%p403) target = $region24
        $region23: #{dwt_mixer_forward.1} parent=11 // pred_region
          %407 = vsyncadd [#allocation6], 0
          %s409 = sshll.u32 %s3, 4
          %s410 = int_to_ptr.hbm [resolvable:$true] %s409
          %s411 = sshll.u32 [#allocation5], 4
          %s412 = int_to_ptr.vmem [resolvable:$true] %s411
          %414 = dma.hbm_to_vmem [thread:$0]  %s410, 16, %s412, [#allocation6]
        $region24: #{dwt_mixer_forward.1} parent=11 // pred_fallthru
          _
        // Predicated region
        $region25: #{dwt_mixer_forward.1} parent=11 // pred_check
          %p415 = pneg %p137
        $region26: #{dwt_mixer_forward.1} parent=11 // pred_check_branch
          %417 = sbr.rel (%p415) target = $region28
        $region27: #{dwt_mixer_forward.1} parent=11 // pred_region
          %419 = vsyncadd [#allocation6], 0
          %s421 = sshll.u32 %s4, 4
          %s422 = int_to_ptr.hbm [resolvable:$true] %s421
          %s423 = sshll.u32 [#allocation7], 4
          %s424 = int_to_ptr.vmem [resolvable:$true] %s423
          %426 = dma.hbm_to_vmem [thread:$0]  %s422, 16, %s424, [#allocation6]
        $region28: #{dwt_mixer_forward.1} parent=11 // pred_fallthru
          _
        // Predicated region
        $region29: #{dwt_mixer_forward.1} parent=11 // pred_check
          %p427 = pneg %p158
        $region30: #{dwt_mixer_forward.1} parent=11 // pred_check_branch
          %429 = sbr.rel (%p427) target = $region32
        $region31: #{dwt_mixer_forward.1} parent=11 // pred_region
          _
        $region32: #{dwt_mixer_forward.1} parent=11 // pred_fallthru
          _
        // Predicated region
        $region33: #{dwt_mixer_forward.1} parent=11 // pred_check
          %p430 = pneg %p179
        $region34: #{dwt_mixer_forward.1} parent=11 // pred_check_branch
          %432 = sbr.rel (%p430) target = $region36
        $region35: #{dwt_mixer_forward.1} parent=11 // pred_region
          _
        $region36: #{dwt_mixer_forward.1} parent=11 // pred_fallthru
          _
        // Predicated region
        $region37: #{dwt_mixer_forward.1} parent=11 // pred_check
          %p433 = pneg %p200
        $region38: #{dwt_mixer_forward.1} parent=11 // pred_check_branch
          %435 = sbr.rel (%p433) target = $region40
        $region39: #{dwt_mixer_forward.1} parent=11 // pred_region
          _
        $region40: #{dwt_mixer_forward.1} parent=11 // pred_fallthru
          _
        // Predicated region
        $region41: #{dwt_mixer_forward.1} parent=11 // pred_check
          %p436 = pneg %p221
        $region42: #{dwt_mixer_forward.1} parent=11 // pred_check_branch
          %438 = sbr.rel (%p436) target = $region44
        $region43: #{dwt_mixer_forward.1} parent=11 // pred_region
          _
        $region44: #{dwt_mixer_forward.1} parent=11 // pred_fallthru
          _
        // Predicated region
        $region45: #{dwt_mixer_forward.1} parent=11 // pred_check
          %p439 = pneg %p242
        $region46: #{dwt_mixer_forward.1} parent=11 // pred_check_branch
          %441 = sbr.rel (%p439) target = $region48
        $region47: #{dwt_mixer_forward.1} parent=11 // pred_region
          _
        $region48: #{dwt_mixer_forward.1} parent=11 // pred_fallthru
          _
        // Predicated region
        $region49: #{dwt_mixer_forward.1} parent=11 // pred_check
          %p442 = pneg %p263
        $region50: #{dwt_mixer_forward.1} parent=11 // pred_check_branch
          %444 = sbr.rel (%p442) target = $region52
        $region51: #{dwt_mixer_forward.1} parent=11 // pred_region
          _
        $region52: #{dwt_mixer_forward.1} parent=11 // pred_fallthru
          _
        // Predicated region
        $region53: #{dwt_mixer_forward.1} parent=11 // pred_check
          %p445 = pneg %p284
        $region54: #{dwt_mixer_forward.1} parent=11 // pred_check_branch
          %447 = sbr.rel (%p445) target = $region56
        $region55: #{dwt_mixer_forward.1} parent=11 // pred_region
          %449 = vsyncadd [#allocation9], 0
          %s450 = sshll.u32 %s11, 4
          %s451 = int_to_ptr.hbm [resolvable:$true] %s450
          %s452 = sshll.u32 [#allocation8], 4
          %s453 = int_to_ptr.vmem [resolvable:$true] %s452
          %458 = dma.hbm_to_vmem [thread:$0]  %s451, 2048, %s453, [#allocation9], 128, 128, 8
        $region56: #{dwt_mixer_forward.1} parent=11 // pred_fallthru
          _
        // Predicated region
        $region57: #{dwt_mixer_forward.1} parent=11 // pred_check
          %p459 = pneg %p305
        $region58: #{dwt_mixer_forward.1} parent=11 // pred_check_branch
          %461 = sbr.rel (%p459) target = $region60
        $region59: #{dwt_mixer_forward.1} parent=11 // pred_region
          _
        $region60: #{dwt_mixer_forward.1} parent=11 // pred_fallthru
          _
        // Predicated region
        $region61: #{dwt_mixer_forward.1} parent=11 // pred_check
          %p462 = pneg %p326
        $region62: #{dwt_mixer_forward.1} parent=11 // pred_check_branch
          %464 = sbr.rel (%p462) target = $region64
        $region63: #{dwt_mixer_forward.1} parent=11 // pred_region
          %466 = vsyncadd [#allocation9], 0
          %s467 = sshll.u32 %s13, 4
          %s468 = int_to_ptr.hbm [resolvable:$true] %s467
          %s469 = sshll.u32 [#allocation10], 4
          %s470 = int_to_ptr.vmem [resolvable:$true] %s469
          %475 = dma.hbm_to_vmem [thread:$0]  %s468, 2048, %s470, [#allocation9], 128, 128, 8
        $region64: #{dwt_mixer_forward.1} parent=11 // pred_fallthru
          _
        // Predicated region
        $region65: #{dwt_mixer_forward.1} parent=11 // pred_check
          %p476 = pneg %p347
        $region66: #{dwt_mixer_forward.1} parent=11 // pred_check_branch
          %478 = sbr.rel (%p476) target = $region68
        $region67: #{dwt_mixer_forward.1} parent=11 // pred_region
          _
        $region68: #{dwt_mixer_forward.1} parent=11 // pred_fallthru
          _
      $region12: #{dwt_mixer_forward.1} parent=5 // pred_fallthru
        _
      %p479 = scmp.lt.s32.totalorder %s27, 2
      // Predicated region
      $region69: #{dwt_mixer_forward.1} parent=5 // pred_check
        %p480 = pneg %p479
      $region70: #{dwt_mixer_forward.1} parent=5 // pred_check_branch
        %482 = sbr.rel (%p480) target = $region72
      $region71: #{dwt_mixer_forward.1} parent=5 // pred_region
        // Predicated region
        $region73: #{dwt_mixer_forward.1} parent=71 // pred_check
          %p483 = pneg %p47
        $region74: #{dwt_mixer_forward.1} parent=71 // pred_check_branch
          %485 = sbr.rel (%p483) target = $region76
        $region75: #{dwt_mixer_forward.1} parent=71 // pred_region
          %p486 = scmp.lt.s32.totalorder %s27, 1
          %s487 = scalar_select %p486, %s27, 1
          %s488 = smul.addr %s487, 8
          %s489 = scalar_lea.vmem %s0, %s488
        $region76: #{dwt_mixer_forward.1} parent=71 // pred_fallthru
          _
      $region72: #{dwt_mixer_forward.1} parent=5 // pred_fallthru
        _
      %p490 = scmp.le.s32.totalorder 1, %s27
      %p491 = scmp.lt.s32.totalorder %s27, 3
      %p492 = pnand %p490, %p491
      %p493 = pneg %p492
      // Predicated region
      $region77: #{dwt_mixer_forward.1} parent=5 // pred_check
        _
      $region78: #{dwt_mixer_forward.1} parent=5 // pred_check_branch
        %495 = sbr.rel (%p492) target = $region80
      $region79: #{dwt_mixer_forward.1} parent=5 // pred_region
        %s496 = ssub.s32 %s27, 1
        // Predicated region
        $region81: #{dwt_mixer_forward.1} parent=79 // pred_check
          %p497 = pneg %p95
        $region82: #{dwt_mixer_forward.1} parent=79 // pred_check_branch
          %499 = sbr.rel (%p497) target = $region84
        $region83: #{dwt_mixer_forward.1} parent=79 // pred_region
          %501 = dma.done [#allocation3], 16
        $region84: #{dwt_mixer_forward.1} parent=79 // pred_fallthru
          _
        // Predicated region
        $region85: #{dwt_mixer_forward.1} parent=79 // pred_check
          %p502 = pneg %p116
        $region86: #{dwt_mixer_forward.1} parent=79 // pred_check_branch
          %504 = sbr.rel (%p502) target = $region88
        $region87: #{dwt_mixer_forward.1} parent=79 // pred_region
          %506 = dma.done [#allocation6], 16
        $region88: #{dwt_mixer_forward.1} parent=79 // pred_fallthru
          _
        // Predicated region
        $region89: #{dwt_mixer_forward.1} parent=79 // pred_check
          %p507 = pneg %p137
        $region90: #{dwt_mixer_forward.1} parent=79 // pred_check_branch
          %509 = sbr.rel (%p507) target = $region92
        $region91: #{dwt_mixer_forward.1} parent=79 // pred_region
          %511 = dma.done [#allocation6], 16
        $region92: #{dwt_mixer_forward.1} parent=79 // pred_fallthru
          _
        // Predicated region
        $region93: #{dwt_mixer_forward.1} parent=79 // pred_check
          %p512 = pneg %p284
        $region94: #{dwt_mixer_forward.1} parent=79 // pred_check_branch
          %514 = sbr.rel (%p512) target = $region96
        $region95: #{dwt_mixer_forward.1} parent=79 // pred_region
          %516 = dma.done [#allocation9], 2048
        $region96: #{dwt_mixer_forward.1} parent=79 // pred_fallthru
          _
        // Predicated region
        $region97: #{dwt_mixer_forward.1} parent=79 // pred_check
          %p517 = pneg %p326
        $region98: #{dwt_mixer_forward.1} parent=79 // pred_check_branch
          %519 = sbr.rel (%p517) target = $region100
        $region99: #{dwt_mixer_forward.1} parent=79 // pred_region
          %521 = dma.done [#allocation9], 2048
        $region100: #{dwt_mixer_forward.1} parent=79 // pred_fallthru
          _
        %p522 = scmp.lt.s32.totalorder %s32, 1
        %s523 = scalar_select %p522, %s32, 1
        %s524 = smul.addr %s523, 8
        %s525 = scalar_lea.vmem %s0, %s524
        %p526 = pneg %p53
        %p527 = pneg %p50
        %p528 = pneg %p74
        %p529 = pneg %p71
        %p530 = pneg %p95
        %p531 = pneg %p92
        %p532 = pneg %p116
        %p533 = pneg %p113
        %p534 = pneg %p137
        %p535 = pneg %p134
        %p536 = pneg %p158
        %p537 = pneg %p155
        %p538 = pneg %p179
        %p539 = pneg %p176
        %p540 = pneg %p200
        %p541 = pneg %p197
        %p542 = pneg %p221
        %p543 = pneg %p218
        %p544 = pneg %p242
        %p545 = pneg %p239
        %p546 = pneg %p263
        %p547 = pneg %p260
        %p548 = pneg %p284
        %p549 = pneg %p281
        %p550 = pneg %p305
        %p551 = pneg %p302
        %p552 = pneg %p326
        %p553 = pneg %p323
        %p554 = pneg %p347
        %p555 = pneg %p344
        %p556 = pneg %p373
        %p557 = pneg %p370
        %s558 = sand.u32 %s360, 1
        %s559 = scalar_lea.sflag [#allocation4], %s558
        %s560 = sand.u32 %s360, 1
        %s561 = smul.addr %s560, 8
        %s562 = scalar_lea.vmem [#allocation11], %s561
        %p563 = scmp.lt.s32.totalorder %s32, 1
        %s564 = scalar_select %p563, %s32, 1
        %s565 = smul.addr %s564, 8
        %s566 = scalar_lea.vmem %s0, %s565
        %v567 = vlaneseq
        %v568 = vand.u32 %v567, 127
        %vm569 = vcmp.lt.s32.totalorder %v568, 32
        %v570 = vsel %vm569, 1, 0
        %v571 = vcvt.s32.f32 %v570
        %v572 = vld [vmem:[%s566] sm:$0xff]
        %v573 = vld [vmem:[%s1] sm:$0xff]
        %v574 = vld [vmem:[%s1 + $0x8] sm:$0xff]
        %v575 = vld [vmem:[%s1 + $0x10] sm:$0xff]
        %v576 = vld [vmem:[%s1 + $0x18] sm:$0xff]
        %v577 = vld [vmem:[#allocation2] sm:$0x1]
        %v579 = vperm.slane %v577, 0
        %vm581 = vcmask 261120
        %v583 = vsel %vm581, %v572, 0
        %585 = vmatpush.msra.mxu0 0.0
        %586 = vmatpush.msra.mxu0 0.0
        %587 = vmatpush.msra.mxu0 0.0
        %588 = vmatpush.msra.mxu0 0.0
        %589 = vmatpush.msra.mxu0 0.0
        %590 = vmatpush.msra.mxu0 0.0
        %591 = vmatpush.msra.mxu0 0.0
        %592 = vmatpush.msra.mxu0 0.0
        %593 = vmatpush.msra.mxu0 0.0
        %594 = vmatpush.msra.mxu0 0.0
        %595 = vmatpush.msra.mxu0 0.0
        %596 = vmatpush.msra.mxu0 0.0
        %597 = vmatpush.msra.mxu0 %v576
        %598 = vmatpush.msra.mxu0 %v575
        %599 = vmatpush.msra.mxu0 %v574
        %600 = vmatpush.msra.mxu0 %v573
        %601 = vmatmul.f32.gmra.mxu0 %v583
        %v602 = vpop.f32.mrf.mxu0
        %v603 = vadd.f32 %v579, %v602
        %604 = vdwg.mxu0
        %v605 = vld [vmem:[#allocation5] sm:$0x1]
        %v606 = vld [vmem:[#allocation7] sm:$0x1]
        %607 = vadd.xlane.f32.xlu0 %v603
        %v608 = vpop.xlane.xlu0 %607
        %v609 = vrcp.pop 32.0
        %v610 = vmul.f32 32.0, %v609
        %v611 = vsub.f32 1.0, %v610
        %v612 = vmul.f32 %v609, %v611
        %v613 = vadd.f32 %v609, %v612
        %vm614 = vweird.f32 %v609
        %v615 = vsel %vm614, %v609, %v613
        %v616 = vmul.f32 %v608, %v615
        %v617 = vsub.f32 %v603, %v616
        %v618 = vmul.f32 %v617, %v571
        %v619 = vmul.f32 %v618, %v618
        %620 = vadd.xlane.f32.xlu0 %v619
        %v621 = vpop.xlane.xlu0 %620
        %v622 = vmul.f32 %v621, %v615
        %v623 = vadd.f32 %v622, 1e-05
        %v624 = vrsqrt.pop %v623
        %v625 = vmul.f32 %v624, %v623
        %v626 = vmul.f32 %v625, %v624
        %v627 = vmul.f32 0.5, %v626
        %v628 = vsub.f32 1.5, %v627
        %v629 = vmul.f32 %v624, %v628
        %vm630 = vweird.f32 %v623
        %vm631 = vweird.f32 %v624
        %vm632 = vmor %vm630, %vm631
        %v633 = vsel %vm632, %v624, %v629
        %v634 = vmul.f32 %v618, %v633
        %v636 = vperm.slane %v605, 0
        %v638 = vmul.f32 %v634, %v636
        %v640 = vperm.slane %v606, 0
        %v642 = vadd.f32 %v638, %v640
        %v643 = vrot.slane %v642, 4
        %vm644 = vcmask 1047556
        %v645 = vsel %vm644, 0.0, %v643
        %v647 = vunpack.c.l.s4 1983009808
        %v648 = vunpack.c.0.s8 %v647
        %v649 = vperm.slane %v642, %v648
        %v651 = vunpack.c.l.s4 1983009808
        %v652 = vunpack.c.0.s8 %v651
        %v653 = vperm.slane %v645, %v652
        %v654 = vrot.slane %v649, 4
        %v655 = vsel %vm644, 0.0, %v654
        %v657 = vunpack.c.l.s4 1934713408
        %v658 = vunpack.c.0.s8 %v657
        %v659 = vperm.slane %v649, %v658
        %v661 = vunpack.c.l.s4 1934713408
        %v662 = vunpack.c.0.s8 %v661
        %v663 = vperm.slane %v655, %v662
        %v664 = vrot.slane %v653, 4
        %v665 = vsel %vm644, 0.0, %v664
        %v667 = vunpack.c.l.s4 1934713408
        %v668 = vunpack.c.0.s8 %v667
        %v669 = vperm.slane %v653, %v668
        %v671 = vunpack.c.l.s4 1934713408
        %v672 = vunpack.c.0.s8 %v671
        %v673 = vperm.slane %v665, %v672
        %v674 = vrot.slane %v659, 4
        %v675 = vsel %vm644, 0.0, %v674
        %v676 = vrot.slane %v663, 4
        %v677 = vsel %vm644, 0.0, %v676
        %v678 = vrot.slane %v669, 4
        %v679 = vsel %vm644, 0.0, %v678
        %v680 = vrot.slane %v673, 4
        %v681 = vsel %vm644, 0.0, %v680
        %v682 = vld [vmem:[%s5] sm:$0xff]
        %v683 = vld [vmem:[%s5 + $0x8] sm:$0xff]
        %v684 = vld [vmem:[%s6] sm:$0xff]
        %v685 = vld [vmem:[%s6 + $0x8] sm:$0xff]
        %687 = vset.pattern.permute.xlu0 0
        %688 = vperm.xlu0 %687, %v684
        %v689 = vpop.permute.xlu0 %688
        %692 = vset.pattern.permute.xlu0 0
        %693 = vperm.xlu0 %692, %v685
        %v694 = vpop.permute.xlu0 %693
        %v704 = vrot.slane %v675, 7
        %vm705 = vcmask 1041409
        %v706 = vsel %vm705, %v704, %v659
        %v707 = vrot.slane %v663, 6
        %vm708 = vcmask 1042434
        %v709 = vsel %vm708, %v707, %v706
        %v710 = vrot.slane %v677, 5
        %vm711 = vcmask 1043459
        %v712 = vsel %vm711, %v710, %v709
        %v713 = vrot.slane %v669, 4
        %vm714 = vcmask 1044484
        %v715 = vsel %vm714, %v713, %v712
        %v716 = vrot.slane %v679, 3
        %vm717 = vcmask 1045509
        %v718 = vsel %vm717, %v716, %v715
        %v719 = vrot.slane %v673, 2
        %vm720 = vcmask 1046534
        %v721 = vsel %vm720, %v719, %v718
        %v722 = vrot.slane %v681, 1
        %vm723 = vcmask 1047559
        %v724 = vsel %vm723, %v722, %v721
        %vm726 = vcmask 64512
        %v728 = vsel %vm726, %v682, 0
        %v731 = vsel %vm726, %v683, 0
        %733 = vmatpush.msra.mxu0 0.0
        %734 = vmatpush.msra.mxu0 0.0
        %735 = vmatpush.msra.mxu0 0.0
        %736 = vmatpush.msra.mxu0 0.0
        %737 = vmatpush.msra.mxu0 0.0
        %738 = vmatpush.msra.mxu0 0.0
        %739 = vmatpush.msra.mxu0 0.0
        %740 = vmatpush.msra.mxu0 0.0
        %741 = vmatpush.msra.mxu0 0.0
        %742 = vmatpush.msra.mxu0 0.0
        %743 = vmatpush.msra.mxu0 0.0
        %744 = vmatpush.msra.mxu0 0.0
        %745 = vmatpush.msra.mxu0 0.0
        %746 = vmatpush.msra.mxu0 0.0
        %747 = vmatpush.msra.mxu0 0.0
        %748 = vmatpush.msra.mxu0 %v724
        %749 = vmatmul.f32.gmra.mxu0 %v728
        %v750 = vpop.f32.mrf.mxu0
        %v751 = vadd.f32 %v689, %v750
        %752 = vmatmul.f32.gmra.mxu0 %v731
        %v753 = vpop.f32.mrf.mxu0
        %v754 = vadd.f32 %v694, %v753
        %755 = vdwg.mxu0
        %v756 = vmul.f32 %v751, %v751
        %v757 = vmul.f32 %v754, %v754
        %v758 = vmul.f32 %v751, %v756
        %v759 = vmul.f32 %v754, %v757
        %v760 = vmul.f32 %v758, 0.044715
        %v761 = vmul.f32 %v759, 0.044715
        %v762 = vadd.f32 %v751, %v760
        %v763 = vadd.f32 %v754, %v761
        %v764 = vmul.f32 %v762, 0.7978846
        %v765 = vmul.f32 %v763, 0.7978846
        %v766 = vtanh.pop %v764
        %v767 = vtanh.pop %v765
        %v768 = vadd.f32 %v766, 1.0
        %v769 = vadd.f32 %v767, 1.0
        %v770 = vmul.f32 %v768, 0.5
        %v771 = vmul.f32 %v769, 0.5
        %v772 = vmul.f32 %v751, %v770
        %v773 = vmul.f32 %v754, %v771
        %v774 = vld [vmem:[%s7] sm:$0xff]
        %v775 = vld [vmem:[%s8] sm:$0xff]
        %777 = vset.pattern.permute.xlu0 0
        %778 = vperm.xlu0 %777, %v775
        %v779 = vpop.permute.xlu0 %778
        %vm781 = vcmask 130048
        %v783 = vsel %vm781, %v774, 0
        %785 = vmatpush.msra.mxu0 0.0
        %786 = vmatpush.msra.mxu0 0.0
        %787 = vmatpush.msra.mxu0 0.0
        %788 = vmatpush.msra.mxu0 0.0
        %789 = vmatpush.msra.mxu0 0.0
        %790 = vmatpush.msra.mxu0 0.0
        %791 = vmatpush.msra.mxu0 0.0
        %792 = vmatpush.msra.mxu0 0.0
        %793 = vmatpush.msra.mxu0 0.0
        %794 = vmatpush.msra.mxu0 0.0
        %795 = vmatpush.msra.mxu0 0.0
        %796 = vmatpush.msra.mxu0 0.0
        %797 = vmatpush.msra.mxu0 0.0
        %798 = vmatpush.msra.mxu0 0.0
        %799 = vmatpush.msra.mxu0 %v773
        %800 = vmatpush.msra.mxu0 %v772
        %801 = vmatmul.f32.gmra.mxu0 %v783
        %v802 = vpop.f32.mrf.mxu0
        %v803 = vadd.f32 %v779, %v802
        %804 = vdwg.mxu0
        %v805 = vmul.f32 %v803, %v571
        %v807 = vrot.slane %v805, 1
        %v808 = vrot.slane %v805, 2
        %v809 = vrot.slane %v805, 3
        %v810 = vrot.slane %v805, 4
        %v811 = vrot.slane %v805, 5
        %v812 = vrot.slane %v805, 6
        %v813 = vrot.slane %v805, 7
        %814 = vst [vmem:[#allocation1] ss:$9 sm:$0xff] %v805
        %s815 = scalar_lea.vmem [#allocation1], 1
        %816 = vst [vmem:[%s815] ss:$9 sm:$0xff] %v807
        %s817 = scalar_lea.vmem [#allocation1], 2
        %818 = vst [vmem:[%s817] ss:$9 sm:$0xff] %v808
        %s819 = scalar_lea.vmem [#allocation1], 3
        %820 = vst [vmem:[%s819] ss:$9 sm:$0xff] %v809
        %s821 = scalar_lea.vmem [#allocation1], 4
        %822 = vst [vmem:[%s821] ss:$9 sm:$0xff] %v810
        %s823 = scalar_lea.vmem [#allocation1], 5
        %824 = vst [vmem:[%s823] ss:$9 sm:$0xff] %v811
        %s825 = scalar_lea.vmem [#allocation1], 6
        %826 = vst [vmem:[%s825] ss:$9 sm:$0xff] %v812
        %s827 = scalar_lea.vmem [#allocation1], 7
        %828 = vst [vmem:[%s827] ss:$9 sm:$0xff] %v813
        %v829 = vld [vmem:[#allocation1] sm:$0xff]
        %v831 = vadd.f32 %v603, %v829
        %v832 = vld [vmem:[%s9] sm:$0x1]
        %v833 = vld [vmem:[%s10] sm:$0x1]
        %834 = vadd.xlane.f32.xlu0 %v831
        %v835 = vpop.xlane.xlu0 %834
        %v836 = vmul.f32 %v835, %v615
        %v837 = vsub.f32 %v831, %v836
        %v838 = vmul.f32 %v837, %v571
        %v839 = vmul.f32 %v838, %v838
        %840 = vadd.xlane.f32.xlu0 %v839
        %v841 = vpop.xlane.xlu0 %840
        %v842 = vmul.f32 %v841, %v615
        %v843 = vadd.f32 %v842, 1e-05
        %v844 = vrsqrt.pop %v843
        %v845 = vmul.f32 %v844, %v843
        %v846 = vmul.f32 %v845, %v844
        %v847 = vmul.f32 0.5, %v846
        %v848 = vsub.f32 1.5, %v847
        %v849 = vmul.f32 %v844, %v848
        %vm850 = vweird.f32 %v843
        %vm851 = vweird.f32 %v844
        %vm852 = vmor %vm850, %vm851
        %v853 = vsel %vm852, %v844, %v849
        %v854 = vmul.f32 %v838, %v853
        %v856 = vperm.slane %v832, 0
        %v858 = vmul.f32 %v854, %v856
        %v860 = vperm.slane %v833, 0
        %v862 = vadd.f32 %v858, %v860
        %v863 = vld [vmem:[#allocation8] sm:$0xff]
        %v864 = vld [vmem:[#allocation8 + $0x8] sm:$0xff]
        %v865 = vld [vmem:[#allocation8 + $0x10] sm:$0xff]
        %v866 = vld [vmem:[#allocation8 + $0x18] sm:$0xff]
        %v867 = vld [vmem:[#allocation8 + $0x20] sm:$0xff]
        %v868 = vld [vmem:[#allocation8 + $0x28] sm:$0xff]
        %v869 = vld [vmem:[#allocation8 + $0x30] sm:$0xff]
        %v870 = vld [vmem:[#allocation8 + $0x38] sm:$0xff]
        %v871 = vld [vmem:[#allocation8 + $0x40] sm:$0xff]
        %v872 = vld [vmem:[#allocation8 + $0x48] sm:$0xff]
        %v873 = vld [vmem:[#allocation8 + $0x50] sm:$0xff]
        %v874 = vld [vmem:[#allocation8 + $0x58] sm:$0xff]
        %v875 = vld [vmem:[#allocation8 + $0x60] sm:$0xff]
        %v876 = vld [vmem:[#allocation8 + $0x68] sm:$0xff]
        %v877 = vld [vmem:[#allocation8 + $0x70] sm:$0xff]
        %v878 = vld [vmem:[#allocation8 + $0x78] sm:$0xff]
        %v879 = vld [vmem:[%s12] sm:$0x1]
        %v881 = vperm.slane %v879, 0
        %883 = vmatpush.msra.mxu0 %v878
        %884 = vmatpush.msra.mxu0 %v877
        %885 = vmatpush.msra.mxu0 %v876
        %886 = vmatpush.msra.mxu0 %v875
        %887 = vmatpush.msra.mxu0 %v874
        %888 = vmatpush.msra.mxu0 %v873
        %889 = vmatpush.msra.mxu0 %v872
        %890 = vmatpush.msra.mxu0 %v871
        %891 = vmatpush.msra.mxu0 %v870
        %892 = vmatpush.msra.mxu0 %v869
        %893 = vmatpush.msra.mxu0 %v868
        %894 = vmatpush.msra.mxu0 %v867
        %895 = vmatpush.msra.mxu0 %v866
        %896 = vmatpush.msra.mxu0 %v865
        %897 = vmatpush.msra.mxu0 %v864
        %898 = vmatpush.msra.mxu0 %v863
        %899 = vmatmul.f32.gmra.mxu0 %v862
        %v900 = vpop.f32.mrf.mxu0
        %v901 = vadd.f32 %v881, %v900
        %902 = vdwg.mxu0
        %v903 = vmul.f32 %v901, %v901
        %v904 = vmul.f32 %v901, %v903
        %v905 = vmul.f32 %v904, 0.044715
        %v906 = vadd.f32 %v901, %v905
        %v907 = vmul.f32 %v906, 0.7978846
        %v908 = vtanh.pop %v907
        %v909 = vadd.f32 %v908, 1.0
        %v910 = vmul.f32 %v909, 0.5
        %v911 = vmul.f32 %v901, %v910
        %v912 = vld [vmem:[#allocation10] sm:$0xff]
        %v913 = vld [vmem:[#allocation10 + $0x8] sm:$0xff]
        %v914 = vld [vmem:[#allocation10 + $0x10] sm:$0xff]
        %v915 = vld [vmem:[#allocation10 + $0x18] sm:$0xff]
        %v916 = vld [vmem:[#allocation10 + $0x20] sm:$0xff]
        %v917 = vld [vmem:[#allocation10 + $0x28] sm:$0xff]
        %v918 = vld [vmem:[#allocation10 + $0x30] sm:$0xff]
        %v919 = vld [vmem:[#allocation10 + $0x38] sm:$0xff]
        %v920 = vld [vmem:[#allocation10 + $0x40] sm:$0xff]
        %v921 = vld [vmem:[#allocation10 + $0x48] sm:$0xff]
        %v922 = vld [vmem:[#allocation10 + $0x50] sm:$0xff]
        %v923 = vld [vmem:[#allocation10 + $0x58] sm:$0xff]
        %v924 = vld [vmem:[#allocation10 + $0x60] sm:$0xff]
        %v925 = vld [vmem:[#allocation10 + $0x68] sm:$0xff]
        %v926 = vld [vmem:[#allocation10 + $0x70] sm:$0xff]
        %v927 = vld [vmem:[#allocation10 + $0x78] sm:$0xff]
        %v928 = vld [vmem:[%s14] sm:$0x1]
        %v930 = vperm.slane %v928, 0
        %932 = vmatpush.msra.mxu0 %v927
        %933 = vmatpush.msra.mxu0 %v926
        %934 = vmatpush.msra.mxu0 %v925
        %935 = vmatpush.msra.mxu0 %v924
        %936 = vmatpush.msra.mxu0 %v923
        %937 = vmatpush.msra.mxu0 %v922
        %938 = vmatpush.msra.mxu0 %v921
        %939 = vmatpush.msra.mxu0 %v920
        %940 = vmatpush.msra.mxu0 %v919
        %941 = vmatpush.msra.mxu0 %v918
        %942 = vmatpush.msra.mxu0 %v917
        %943 = vmatpush.msra.mxu0 %v916
        %944 = vmatpush.msra.mxu0 %v915
        %945 = vmatpush.msra.mxu0 %v914
        %946 = vmatpush.msra.mxu0 %v913
        %947 = vmatpush.msra.mxu0 %v912
        %948 = vmatmul.f32.gmra.mxu0 %v911
        %v949 = vpop.f32.mrf.mxu0
        %v950 = vadd.f32 %v930, %v949
        %951 = vdwg.mxu0
        %v952 = vadd.f32 %v831, %v950
        %953 = vst.msk [vmem:[%s562] sm:$0xff] %vm581, %v952
        %s954 = sand.u32 %s360, 1
        %s955 = scalar_lea.sflag [#allocation4], %s954
        %s956 = sand.u32 %s360, 1
        %s957 = smul.addr %s956, 8
        %s958 = scalar_lea.vmem [#allocation11], %s957
        // Predicated region
        $region101: #{dwt_mixer_forward.1} parent=79 // pred_check
          %p959 = pneg %p370
        $region102: #{dwt_mixer_forward.1} parent=79 // pred_check_branch
          %961 = sbr.rel (%p959) target = $region104
        $region103: #{dwt_mixer_forward.1} parent=79 // pred_region
          %963 = vsyncadd %s955, 0
          %s964 = smul.addr %s32, 8
          %s965 = scalar_lea.hbm %s15, %s964
          %s967 = sshll.u32 %s958, 4
          %s968 = int_to_ptr.vmem [resolvable:$true] %s967
          %s969 = sshll.u32 %s965, 4
          %s970 = int_to_ptr.hbm [resolvable:$true] %s969
          %972 = dma.vmem_to_hbm [thread:$0]  %s968, 128, %s970, %s955
        $region104: #{dwt_mixer_forward.1} parent=79 // pred_fallthru
          _
      $region80: #{dwt_mixer_forward.1} parent=5 // pred_fallthru
        _
      %p973 = scmp.le.s32.totalorder 2, %s27
      // Predicated region
      $region105: #{dwt_mixer_forward.1} parent=5 // pred_check
        %p974 = pneg %p973
      $region106: #{dwt_mixer_forward.1} parent=5 // pred_check_branch
        %976 = sbr.rel (%p974) target = $region108
      $region107: #{dwt_mixer_forward.1} parent=5 // pred_region
        %s977 = ssub.s32 %s27, 2
        // Predicated region
        $region109: #{dwt_mixer_forward.1} parent=107 // pred_check
          %p978 = pneg %p376
        $region110: #{dwt_mixer_forward.1} parent=107 // pred_check_branch
          %980 = sbr.rel (%p978) target = $region112
        $region111: #{dwt_mixer_forward.1} parent=107 // pred_region
          %s981 = sand.u32 %s361, 1
          %s982 = scalar_lea.sflag [#allocation4], %s981
          %s983 = sand.u32 %s361, 1
          %s984 = smul.addr %s983, 8
          %s985 = scalar_lea.vmem [#allocation11], %s984
          %987 = dma.done %s982, 128
        $region112: #{dwt_mixer_forward.1} parent=107 // pred_fallthru
          _
      $region108: #{dwt_mixer_forward.1} parent=5 // pred_fallthru
        _
    $region6: #{dwt_mixer_forward.1} parent=1 // loop_footer
      %s31 = sadd.s32 1, %s27
    $region7: #{dwt_mixer_forward.1} parent=1 // loop_footer_branch
      %26 = sbr.rel target = $region3
    $region8: #{dwt_mixer_forward.1} parent=1 // loop_exit
      _
    %988 = vsyncpa [#allocation3], 1
    %s989 = scalar_lea.sflag [#allocation3], 1
    %990 = vsyncpa %s989, 1
    %991 = vsyncpa [#allocation6], 1
    %992 = vsyncpa [#allocation9], 1
    %993 = vsyncpa [#allocation4], 1
    %s994 = scalar_lea.sflag [#allocation4], 1
    %995 = vsyncpa %s994, 1

</llo_original>
